<compile_context>
chip_gen: v5e
topology: v5e:2x2
jax: 0.10.0
libtpu: 0.0.40
codegen_flags: <defaults>
</compile_context>

<pallas_src>
import functools

import jax
import jax.numpy as jnp
import numpy as np
from jax import lax
from jax.experimental import pallas as pl
from jax.experimental.pallas import tpu as pltpu

# Output-slab lane layout (one 128-lane f32 slab per batch row).
_HEAD_LANES = 128
_VAD_LO = 0        # lanes [0, 3)   : sigmoid(dense22(h))
_LOGIT_LO = 8      # lanes [8, 8+C) : dense21(h)


def _round_up(n, m):
    return ((n + m - 1) // m) * m


def _pad2d(a, rows, cols):
    r, c = a.shape
    return jnp.pad(a, ((0, rows - r), (0, cols - c)))


def _is_v5e():
    try:
        kind = jax.devices()[0].device_kind.lower()
    except Exception:
        return False
    return ("v5 lite" in kind) or ("v5e" in kind) or ("v5lite" in kind)


# ----------------------------------------------------------------------------
# Main kernel: dense1 -> tanh -> fused head, plus per-tile cluster partials.
# Grid = (batch tiles [parallel], hidden chunks [arbitrary]).
# ----------------------------------------------------------------------------
def _sccl_head_kernel(x_ref, w1_ref, b1_ref, wh_ref, bh_ref, one_hot_ref,
                      slab_ref, partial_ref,            # outputs
                      head_acc,                         # VMEM scratch [Bt,128]
                      *, act_dtype):
    j = pl.program_id(1)

    @pl.when(j == 0)
    def _init():
        head_acc[...] = jnp.zeros_like(head_acc)

    # dense1 chunk (f32 MXU accumulation) -> tanh -> head-matmul chunk.
    h = jnp.dot(x_ref[...], w1_ref[...],
                preferred_element_type=jnp.float32) + b1_ref[...]
    h = jnp.tanh(h.astype(act_dtype))
    head_acc[...] += jnp.dot(h.astype(wh_ref.dtype), wh_ref[...],
                             preferred_element_type=jnp.float32)

    @pl.when(j == pl.num_programs(1) - 1)
    def _emit():
        head = head_acc[...] + bh_ref[...]               # [Bt, 128] f32
        sig = jax.nn.sigmoid(head)
        col = lax.broadcasted_iota(jnp.int32, head.shape, 1)
        # vad lanes get sigmoid; logit lanes keep the raw affine output;
        # padding lanes stay exactly zero (zero weight/bias columns).
        slab_ref[...] = jnp.where(col < _VAD_LO + 3, sig, head)

        vad = sig[:, _VAD_LO:_VAD_LO + 3]                # [Bt, 3]
        # Per-tile cluster partial sum.  Padded batch columns of one_hot are
        # exactly zero, so padded x rows (vad = sigmoid(bias) != 0) do not
        # contribute.  Disjoint output block per batch tile -> the batch axis
        # can safely be megacore-"parallel".
        partial_ref[0] = jnp.dot(one_hot_ref[...].astype(jnp.float32), vad,
                                 preferred_element_type=jnp.float32)


# ----------------------------------------------------------------------------
# Micro finalize kernel: O(L^2) contrastive loss from the summed cluster stats.
# ----------------------------------------------------------------------------
def _sccl_loss_kernel(cluster_ref, proto_ref, mask_ref, loss_ref, *,
                      batch_size, num_labels, inv_temperature):
    cluster = cluster_ref[...] * (1.0 / batch_size)      # [L, 3]
    proto = proto_ref[...]                               # [L, 3]

    # diag(cluster @ proto.T) == row-wise dot; no eye mask needed.
    up = jnp.sum(cluster * proto, axis=1, keepdims=True) * inv_temperature
    cl = lax.dot_general(cluster, proto, (((1,), (1,)), ((), ())),
                         preferred_element_type=jnp.float32) * inv_temperature

    # Numerically stable logsumexp.
    m = jnp.max(cl, axis=1, keepdims=True)
    lse = m + jnp.log(jnp.sum(jnp.exp(cl - m), axis=1, keepdims=True))

    masked = (up - lse) * mask_ref[...]                  # [L, 1]
    loss_ref[...] = -(1.0 / num_labels) * jnp.sum(masked, keepdims=True)


# ----------------------------------------------------------------------------
# Weight packing (hoist out of the per-call path; weights are static).
# ----------------------------------------------------------------------------
def pack_adapter_sccl_params(params, *, compute_dtype=jnp.bfloat16,
                             block_h=1024):
    """Pack/pad the head weights once (directly in compute dtype)."""
    H, H_out = params["w1"].shape
    assert H == H_out, "dense1 must be square"
    C = params["w21"].shape[1]
    assert C <= _HEAD_LANES - _LOGIT_LO, "num_class too large for head slab"

    cd = compute_dtype
    H_in_pad = _round_up(H, 128)                  # x cols / w1 rows
    Hk = min(H_in_pad, _round_up(block_h, 128))   # hidden chunk (w1 cols)
    K_pad = _round_up(H, Hk)                      # padded intermediate dim

    w1_p = _pad2d(params["w1"].astype(cd), H_in_pad, K_pad)
    b1_p = _pad2d(params["b1"].reshape(1, H).astype(jnp.float32), 1, K_pad)

    # Fused head weight: lanes [0:3) = w22 (vad), lanes [8:8+C) = w21 (logits).
    w_head = jnp.zeros((K_pad, _HEAD_LANES), cd)
    w_head = w_head.at[:H, _VAD_LO:_VAD_LO + 3].set(params["w22"].astype(cd))
    w_head = w_head.at[:H, _LOGIT_LO:_LOGIT_LO + C].set(
        params["w21"].astype(cd))

    b_head = jnp.zeros((1, _HEAD_LANES), jnp.float32)
    b_head = b_head.at[0, _VAD_LO:_VAD_LO + 3].set(
        params["b22"].reshape(3).astype(jnp.float32))
    b_head = b_head.at[0, _LOGIT_LO:_LOGIT_LO + C].set(
        params["b21"].reshape(C).astype(jnp.float32))

    return dict(w1=w1_p, b1=b1_p, w_head=w_head, b_head=b_head,
                H=H, C=C, H_in_pad=H_in_pad, Hk=Hk, K_pad=K_pad,
                compute_dtype=cd)


# ----------------------------------------------------------------------------
# Forward wrapper.
# ----------------------------------------------------------------------------
def adapter_sccl_forward(x_cls, packed, label_VAD, one_hot_vad_labels,
                         label_mask, *, temperature=1.0, block_b=512,
                         vmem_limit_bytes=48 * 1024 * 1024,
                         activation_dtype=None):
    """Pallas implementation of AdapterSCCLClassifier.forward (post-encoder).

    Returns (dense21(h), SCCL loss, vad) like the PyTorch module.
    """
    B, H = x_cls.shape
    assert H == packed["H"]
    C = packed["C"]
    L = label_VAD.shape[0]
    assert one_hot_vad_labels.shape == (L, B)
    cd = packed["compute_dtype"]
    H_in_pad, Hk, K_pad = packed["H_in_pad"], packed["Hk"], packed["K_pad"]
    nk = K_pad // Hk

    # Batch tile: one 16-aligned block for small batches (bf16 sublane
    # packing), otherwise a 256-aligned tile (2x256^2 MXU on v6e/v7x; also a
    # multiple of 128 for v5e).
    if _round_up(B, 16) <= block_b:
        Bt = _round_up(B, 16)
    else:
        Bt = _round_up(block_b, 256)
    B_pad = _round_up(B, Bt)
    nb = B_pad // Bt

    # bf16 tanh/sigmoid on v6e/v7x (native bf16 VPU/EUP); keep f32 on v5e.
    if activation_dtype is None:
        activation_dtype = (cd if (np.dtype(cd) == np.dtype(jnp.bfloat16)
                                   and not _is_v5e()) else jnp.float32)

    # Pad activations directly in compute dtype (no f32 intermediates).
    x_p = _pad2d(x_cls.astype(cd), B_pad, H_in_pad)
    # IMPORTANT: padded batch columns of one_hot must be exactly zero — padded
    # x rows still produce vad = sigmoid(bias) != 0; only the zero one_hot
    # columns keep them out of the cluster statistic.  jnp.pad guarantees it.
    one_hot_p = _pad2d(one_hot_vad_labels.astype(cd), L, B_pad)
    label_vad_f32 = label_VAD.astype(jnp.float32)
    label_mask_p = label_mask.reshape(L, 1).astype(jnp.float32)

    # Conservative VMEM budget guard (double-buffered everything).
    itemsize = jnp.dtype(cd).itemsize
    est = (2 * Bt * H_in_pad * itemsize               # x
           + 2 * H_in_pad * Hk * itemsize             # w1 chunk
           + 2 * 8 * Hk * 4                           # b1 chunk
           + 2 * Hk * _HEAD_LANES * itemsize          # w_head chunk
           + 8 * _HEAD_LANES * 4                      # b_head
           + 2 * max(L, 8) * Bt * itemsize            # one_hot tile
           + 2 * Bt * _HEAD_LANES * 4                 # slab out
           + 2 * 8 * 128 * 4                          # partials out
           + Bt * _HEAD_LANES * 4)                    # head accumulator
    if est > vmem_limit_bytes:
        raise ValueError(
            f"Estimated VMEM use {est / 2**20:.1f} MiB exceeds the "
            f"{vmem_limit_bytes / 2**20:.1f} MiB limit; lower block_b or "
            f"block_h (repack params).")

    kernel = functools.partial(_sccl_head_kernel, act_dtype=activation_dtype)

    def call(single_buffer_consts):
        # Grid-invariant operands only need one VMEM buffer.
        const_pm = ({"pipeline_mode": pl.Buffered(1)}
                    if single_buffer_consts else {})
        w_pm = const_pm if nk == 1 else {}
        in_specs = [
            pl.BlockSpec((Bt, H_in_pad), lambda i, j: (i, 0)),                 # x
            pl.BlockSpec((H_in_pad, Hk), lambda i, j: (0, j), **w_pm),         # w1
            pl.BlockSpec((1, Hk), lambda i, j: (0, j), **w_pm),                # b1
            pl.BlockSpec((Hk, _HEAD_LANES), lambda i, j: (j, 0), **w_pm),      # w_head
            pl.BlockSpec((1, _HEAD_LANES), lambda i, j: (0, 0), **const_pm),   # b_head
            pl.BlockSpec((L, Bt), lambda i, j: (0, i)),                        # one_hot
        ]
        out_specs = [
            pl.BlockSpec((Bt, _HEAD_LANES), lambda i, j: (i, 0)),              # slab
            pl.BlockSpec((1, L, 3), lambda i, j: (i, 0, 0)),                   # partials
        ]
        return pl.pallas_call(
            kernel,
            out_shape=(jax.ShapeDtypeStruct((B_pad, _HEAD_LANES), jnp.float32),
                       jax.ShapeDtypeStruct((nb, L, 3), jnp.float32)),
            grid_spec=pltpu.PrefetchScalarGridSpec(
                num_scalar_prefetch=0,
                grid=(nb, nk),
                in_specs=in_specs,
                out_specs=out_specs,
                scratch_shapes=[pltpu.VMEM((Bt, _HEAD_LANES), jnp.float32)]),
            compiler_params=pltpu.CompilerParams(
                # Batch tiles are independent (per-tile partial outputs), so
                # the batch axis shards across TensorCores on v7x; the hidden
                # chunk axis carries the head accumulation -> sequential.
                dimension_semantics=("parallel", "arbitrary"),
                vmem_limit_bytes=vmem_limit_bytes),
        )(x_p, packed["w1"], packed["b1"], packed["w_head"], packed["b_head"],
          one_hot_p)

    try:
        slab, partials = call(True)
    except Exception:
        # Fallback if pipeline_mode/Buffered(1) is unsupported in this build.
        slab, partials = call(False)

    # Tiny [nb, L, 3] -> [L, 3] reduce; finalize (logsumexp contrast) stays in
    # a micro Pallas kernel.
    cluster_sum = jnp.sum(partials, axis=0)
    loss_out = pl.pallas_call(
        functools.partial(_sccl_loss_kernel, batch_size=B, num_labels=L,
                          inv_temperature=1.0 / temperature),
        out_shape=jax.ShapeDtypeStruct((1, 1), jnp.float32),
    )(cluster_sum, label_vad_f32, label_mask_p)

    logits = slab[:B, _LOGIT_LO:_LOGIT_LO + C]
    vad = slab[:B, _VAD_LO:_VAD_LO + 3]
    loss = loss_out[0, 0]
    return logits, loss, vad


# ----------------------------------------------------------------------------
# Pure-jnp reference mirroring the PyTorch forward (eval mode).
# ----------------------------------------------------------------------------
def _reference(x_cls, params, label_VAD, one_hot, label_mask,
               temperature=1.0, compute_dtype=jnp.float32):
    cd = compute_dtype
    mm = lambda a, b: jnp.dot(a, b, preferred_element_type=jnp.float32,
                              precision=lax.Precision.HIGHEST)
    h = jnp.tanh(mm(x_cls.astype(cd), params["w1"].astype(cd)) + params["b1"])
    h_c = h.astype(cd)
    vad = jax.nn.sigmoid(mm(h_c, params["w22"].astype(cd)) + params["b22"])
    logits_out = mm(h_c, params["w21"].astype(cd)) + params["b21"]

    masked = one_hot[:, :, None] * vad[None, :, :]
    cluster = jnp.mean(masked, axis=1)
    cl = jnp.dot(cluster, label_VAD.T,
                 precision=lax.Precision.HIGHEST) / temperature
    up = jnp.diag(cl)
    all_l = jnp.log(jnp.sum(jnp.exp(cl), axis=1))
    loss = -jnp.mean((up - all_l) * label_mask)
    return logits_out, loss, vad


if __name__ == "__main__":
    # Small shapes consistent with the module's forward.
    B, S, H = 4, 8, 32          # batch, seq, hidden_size
    C = 7                       # num_class
    L = 6                       # number of emotion prototypes (label_num)

    key = jax.random.PRNGKey(0)
    keys = jax.random.split(key, 10)

    # Synthetic encoder output (stands in for self.bert(x, mask)[0]).
    hidden = jax.random.normal(keys[0], (B, S, H), jnp.float32)
    x_cls = hidden[:, 0, :]     # x[:, 0, :].squeeze(1) -> [B, H]

    # Deterministic parameter init (stored as [in, out]).
    scale = 0.05
    params = {
        "w1":  scale * jax.random.normal(keys[1], (H, H), jnp.float32),
        "b1":  scale * jax.random.normal(keys[2], (1, H), jnp.float32),
        "w21": scale * jax.random.normal(keys[3], (H, C), jnp.float32),
        "b21": scale * jax.random.normal(keys[4], (1, C), jnp.float32),
        "w22": scale * jax.random.normal(keys[5], (H, 3), jnp.float32),
        "b22": scale * jax.random.normal(keys[6], (1, 3), jnp.float32),
    }

    # VAD prototypes, one-hot emotion membership, and per-emotion label mask.
    label_VAD = jax.random.uniform(keys[7], (L, 3), jnp.float32)
    labels = jax.random.randint(keys[8], (B,), 0, L)
    one_hot = (labels[None, :] == jnp.arange(L)[:, None]).astype(jnp.float32)
    label_mask = (jnp.sum(one_hot, axis=1) > 0).astype(jnp.float32)

    # ---- f32 path -----------------------------------------------------------
    packed32 = pack_adapter_sccl_params(params, compute_dtype=jnp.float32)
    logits, loss, vad = adapter_sccl_forward(
        x_cls, packed32, label_VAD, one_hot, label_mask)
    jax.block_until_ready((logits, loss, vad))

    r_logits, r_loss, r_vad = _reference(
        x_cls, params, label_VAD, one_hot, label_mask,
        compute_dtype=jnp.float32)
    assert np.allclose(np.asarray(logits), np.asarray(r_logits), atol=2e-3)
    assert np.allclose(np.asarray(vad), np.asarray(r_vad), atol=2e-3)
    assert np.allclose(np.asarray(loss), np.asarray(r_loss), atol=2e-3)

    # ---- bf16 matmul path (MXU throughput / halved DMA bytes) ---------------
    packed16 = pack_adapter_sccl_params(params, compute_dtype=jnp.bfloat16)
    logits16, loss16, vad16 = adapter_sccl_forward(
        x_cls, packed16, label_VAD, one_hot, label_mask)
    jax.block_until_ready((logits16, loss16, vad16))

    r_logits16, r_loss16, r_vad16 = _reference(
        x_cls, params, label_VAD, one_hot, label_mask,
        compute_dtype=jnp.bfloat16)
    assert np.allclose(np.asarray(logits16), np.asarray(r_logits16), atol=2e-2)
    assert np.allclose(np.asarray(vad16), np.asarray(r_vad16), atol=2e-2)
    assert np.allclose(np.asarray(loss16), np.asarray(r_loss16), atol=2e-2)

    print("KERNEL_OK")
</pallas_src>

<mosaic_0001>
module attributes {stable_mosaic.version = 11 : i64} {
  func.func @_sccl_head_kernel(%arg0: i32, %arg1: i32, %arg2: memref<16x128xf32, #tpu.memory_space<vmem>>, %arg3: memref<128x128xf32, #tpu.memory_space<vmem>>, %arg4: memref<1x128xf32, #tpu.memory_space<vmem>>, %arg5: memref<128x128xf32, #tpu.memory_space<vmem>>, %arg6: memref<1x128xf32, #tpu.memory_space<vmem>>, %arg7: memref<6x16xf32, #tpu.memory_space<vmem>>, %arg8: memref<16x128xf32, #tpu.memory_space<vmem>>, %arg9: memref<1x6x3xf32, #tpu.memory_space<vmem>>, %arg10: memref<16x128xf32, #tpu.memory_space<vmem>>) attributes {dimension_semantics = [#tpu.dimension_semantics<parallel>, #tpu.dimension_semantics<arbitrary>], iteration_bounds = array<i64: 1, 1>, scalar_prefetch = 0 : i64, scratch_operands = 1 : i64, tpu.core_type = #tpu.core_type<tc>, window_params = [{transform_indices = @transform_0, window_bounds = array<i64: 16, 128>}, {pipeline_mode = #tpu.pipeline_mode<synchronous>, transform_indices = @transform_1, window_bounds = array<i64: 128, 128>}, {pipeline_mode = #tpu.pipeline_mode<synchronous>, transform_indices = @transform_2, window_bounds = array<i64: 1, 128>}, {pipeline_mode = #tpu.pipeline_mode<synchronous>, transform_indices = @transform_3, window_bounds = array<i64: 128, 128>}, {pipeline_mode = #tpu.pipeline_mode<synchronous>, transform_indices = @transform_4, window_bounds = array<i64: 1, 128>}, {transform_indices = @transform_5, window_bounds = array<i64: 6, 16>}, {transform_indices = @transform_6, window_bounds = array<i64: 16, 128>}, {transform_indices = @transform_7, window_bounds = array<i64: 1, 6, 3>}]} {
    %c0_i32 = arith.constant 0 : i32
    %0 = arith.cmpi eq, %arg1, %c0_i32 : i32
    %1 = arith.extui %0 : i1 to i32
    %c0_i32_0 = arith.constant 0 : i32
    %2 = arith.cmpi ne, %1, %c0_i32_0 : i32
    scf.if %2 {
      %cst_15 = arith.constant 0.000000e+00 : f32
      %18 = vector.broadcast %cst_15 : f32 to vector<16x128xf32>
      %c0_16 = arith.constant 0 : index
      %c0_17 = arith.constant 0 : index
      %19 = vector.load %arg10[%c0_16, %c0_17] : memref<16x128xf32, #tpu.memory_space<vmem>>, vector<16x128xf32>
      tpu.vector_store %arg10[%c0_16, %c0_17], %18 {strides = array<i32>} : memref<16x128xf32, #tpu.memory_space<vmem>>, vector<16x128xf32>,
    } else {
    }
    %c0 = arith.constant 0 : index
    %c0_1 = arith.constant 0 : index
    %3 = vector.load %arg2[%c0, %c0_1] : memref<16x128xf32, #tpu.memory_space<vmem>>, vector<16x128xf32>
    %c0_2 = arith.constant 0 : index
    %c0_3 = arith.constant 0 : index
    %4 = vector.load %arg3[%c0_2, %c0_3] : memref<128x128xf32, #tpu.memory_space<vmem>>, vector<128x128xf32>
    %cst = arith.constant dense<0.000000e+00> : vector<16x128xf32>
    %5 = tpu.matmul %3, %4, %cst {dimension_numbers = #tpu.dot_dimension_numbers<[1], [0], [0], [1], [0, 0, 1, 1], [], []>} : vector<16x128xf32>, vector<128x128xf32>, vector<16x128xf32> -> vector<16x128xf32>
    %c0_4 = arith.constant 0 : index
    %c0_5 = arith.constant 0 : index
    %6 = vector.load %arg4[%c0_4, %c0_5] : memref<1x128xf32, #tpu.memory_space<vmem>>, vector<1x128xf32>
    %7 = vector.broadcast %6 : vector<1x128xf32> to vector<16x128xf32>
    %8 = arith.addf %5, %7 : vector<16x128xf32>
    %9 = math.tanh %8 : vector<16x128xf32>
    %c0_6 = arith.constant 0 : index
    %c0_7 = arith.constant 0 : index
    %10 = vector.load %arg10[%c0_6, %c0_7] : memref<16x128xf32, #tpu.memory_space<vmem>>, vector<16x128xf32>
    %c0_8 = arith.constant 0 : index
    %c0_9 = arith.constant 0 : index
    %11 = vector.load %arg5[%c0_8, %c0_9] : memref<128x128xf32, #tpu.memory_space<vmem>>, vector<128x128xf32>
    %cst_10 = arith.constant dense<0.000000e+00> : vector<16x128xf32>
    %12 = tpu.matmul %9, %11, %cst_10 {dimension_numbers = #tpu.dot_dimension_numbers<[1], [0], [0], [1], [0, 0, 1, 1], [], []>} : vector<16x128xf32>, vector<128x128xf32>, vector<16x128xf32> -> vector<16x128xf32>
    %13 = arith.addf %10, %12 : vector<16x128xf32>
    %c0_11 = arith.constant 0 : index
    %c0_12 = arith.constant 0 : index
    %14 = vector.load %arg10[%c0_11, %c0_12] : memref<16x128xf32, #tpu.memory_space<vmem>>, vector<16x128xf32>
    tpu.vector_store %arg10[%c0_11, %c0_12], %13 {strides = array<i32>} : memref<16x128xf32, #tpu.memory_space<vmem>>, vector<16x128xf32>,
    %c0_i32_13 = arith.constant 0 : i32
    %15 = arith.cmpi eq, %arg1, %c0_i32_13 : i32
    %16 = arith.extui %15 : i1 to i32
    %c0_i32_14 = arith.constant 0 : i32
    %17 = arith.cmpi ne, %16, %c0_i32_14 : i32
    scf.if %17 {
      %c0_15 = arith.constant 0 : index
      %c0_16 = arith.constant 0 : index
      %18 = vector.load %arg10[%c0_15, %c0_16] : memref<16x128xf32, #tpu.memory_space<vmem>>, vector<16x128xf32>
      %c0_17 = arith.constant 0 : index
      %c0_18 = arith.constant 0 : index
      %19 = vector.load %arg6[%c0_17, %c0_18] : memref<1x128xf32, #tpu.memory_space<vmem>>, vector<1x128xf32>
      %20 = vector.broadcast %19 : vector<1x128xf32> to vector<16x128xf32>
      %21 = arith.addf %18, %20 : vector<16x128xf32>
      %22 = arith.negf %21 : vector<16x128xf32>
      %23 = math.exp %22 : vector<16x128xf32>
      %cst_19 = arith.constant 1.000000e+00 : f32
      %24 = vector.broadcast %cst_19 : f32 to vector<16x128xf32>
      %25 = arith.addf %24, %23 : vector<16x128xf32>
      %26 = arith.divf %24, %25 : vector<16x128xf32>
      %27 = tpu.iota {dimensions = array<i32: 1>} : vector<16x128xi32>
      %c3_i32 = arith.constant 3 : i32
      %28 = vector.broadcast %c3_i32 : i32 to vector<16x128xi32>
      %29 = arith.cmpi slt, %27, %28 : vector<16x128xi32>
      %30 = arith.select %29, %26, %21 : vector<16x128xi1>, vector<16x128xf32>
      %c0_20 = arith.constant 0 : index
      %c0_21 = arith.constant 0 : index
      %31 = vector.load %arg8[%c0_20, %c0_21] : memref<16x128xf32, #tpu.memory_space<vmem>>, vector<16x128xf32>
      tpu.vector_store %arg8[%c0_20, %c0_21], %30 {strides = array<i32>} : memref<16x128xf32, #tpu.memory_space<vmem>>, vector<16x128xf32>,
      %32 = vector.extract_strided_slice %26 {offsets = [0, 0], sizes = [16, 3], strides = [1, 1]} : vector<16x128xf32> to vector<16x3xf32>
      %c0_22 = arith.constant 0 : index
      %c0_23 = arith.constant 0 : index
      %33 = vector.load %arg7[%c0_22, %c0_23] : memref<6x16xf32, #tpu.memory_space<vmem>>, vector<6x16xf32>
      %cst_24 = arith.constant dense<0.000000e+00> : vector<6x3xf32>
      %34 = tpu.matmul %33, %32, %cst_24 {dimension_numbers = #tpu.dot_dimension_numbers<[1], [0], [0], [1], [0, 0, 1, 1], [], []>} : vector<6x16xf32>, vector<16x3xf32>, vector<6x3xf32> -> vector<6x3xf32>
      %c0_25 = arith.constant 0 : index
      %c0_26 = arith.constant 0 : index
      %c0_27 = arith.constant 0 : index
      %35 = vector.load %arg9[%c0_25, %c0_26, %c0_27] : memref<1x6x3xf32, #tpu.memory_space<vmem>>, vector<1x6x3xf32>
      %36 = vector.shape_cast %35 : vector<1x6x3xf32> to vector<6x3xf32>
      %37 = vector.shape_cast %34 : vector<6x3xf32> to vector<1x6x3xf32>
      tpu.vector_store %arg9[%c0_25, %c0_26, %c0_27], %37 {strides = array<i32>} : memref<1x6x3xf32, #tpu.memory_space<vmem>>, vector<1x6x3xf32>,
    } else {
    }
    return
  }
  func.func @transform_0(%arg0: i32, %arg1: i32) -> (i32, i32) {
    %c0_i32 = arith.constant 0 : i32
    %c0_i32_0 = arith.constant 0 : i32
    return %arg0, %c0_i32 : i32, i32
  }
  func.func @transform_1(%arg0: i32, %arg1: i32) -> (i32, i32) {
    %c0_i32 = arith.constant 0 : i32
    %c0_i32_0 = arith.constant 0 : i32
    return %c0_i32, %arg1 : i32, i32
  }
  func.func @transform_2(%arg0: i32, %arg1: i32) -> (i32, i32) {
    %c0_i32 = arith.constant 0 : i32
    %c0_i32_0 = arith.constant 0 : i32
    return %c0_i32, %arg1 : i32, i32
  }
  func.func @transform_3(%arg0: i32, %arg1: i32) -> (i32, i32) {
    %c0_i32 = arith.constant 0 : i32
    %c0_i32_0 = arith.constant 0 : i32
    return %arg1, %c0_i32 : i32, i32
  }
  func.func @transform_4(%arg0: i32, %arg1: i32) -> (i32, i32) {
    %c0_i32 = arith.constant 0 : i32
    %c0_i32_0 = arith.constant 0 : i32
    %c0_i32_1 = arith.constant 0 : i32
    return %c0_i32, %c0_i32_0 : i32, i32
  }
  func.func @transform_5(%arg0: i32, %arg1: i32) -> (i32, i32) {
    %c0_i32 = arith.constant 0 : i32
    %c0_i32_0 = arith.constant 0 : i32
    return %c0_i32, %arg0 : i32, i32
  }
  func.func @transform_6(%arg0: i32, %arg1: i32) -> (i32, i32) {
    %c0_i32 = arith.constant 0 : i32
    %c0_i32_0 = arith.constant 0 : i32
    return %arg0, %c0_i32 : i32, i32
  }
  func.func @transform_7(%arg0: i32, %arg1: i32) -> (i32, i32, i32) {
    %c0_i32 = arith.constant 0 : i32
    %c0_i32_0 = arith.constant 0 : i32
    %c0_i32_1 = arith.constant 0 : i32
    return %arg0, %c0_i32, %c0_i32_0 : i32, i32, i32
  }
}

module attributes {stable_mosaic.version = 11 : i64} {
  func.func @_sccl_head_kernel(%arg0: i32, %arg1: i32, %arg2: memref<16x128xf32, #tpu.memory_space<vmem>>, %arg3: memref<128x128xf32, #tpu.memory_space<vmem>>, %arg4: memref<1x128xf32, #tpu.memory_space<vmem>>, %arg5: memref<128x128xf32, #tpu.memory_space<vmem>>, %arg6: memref<1x128xf32, #tpu.memory_space<vmem>>, %arg7: memref<6x16xf32, #tpu.memory_space<vmem>>, %arg8: memref<16x128xf32, #tpu.memory_space<vmem>>, %arg9: memref<1x6x3xf32, #tpu.memory_space<vmem>>, %arg10: memref<16x128xf32, #tpu.memory_space<vmem>>) attributes {dimension_semantics = [#tpu.dimension_semantics<parallel>, #tpu.dimension_semantics<arbitrary>], iteration_bounds = array<i64: 1, 1>, scalar_prefetch = 0 : i64, scratch_operands = 1 : i64, tpu.core_type = #tpu.core_type<tc>, window_params = [{transform_indices = @transform_0, window_bounds = array<i64: 16, 128>}, {transform_indices = @transform_1, window_bounds = array<i64: 128, 128>}, {transform_indices = @transform_2, window_bounds = array<i64: 1, 128>}, {transform_indices = @transform_3, window_bounds = array<i64: 128, 128>}, {pipeline_mode = #tpu.pipeline_mode<synchronous>, transform_indices = @transform_4, window_bounds = array<i64: 1, 128>}, {transform_indices = @transform_5, window_bounds = array<i64: 6, 16>}, {transform_indices = @transform_6, window_bounds = array<i64: 16, 128>}, {transform_indices = @transform_7, window_bounds = array<i64: 1, 6, 3>}]} {
    %c0_i32 = arith.constant 0 : i32
    %0 = arith.cmpi eq, %arg1, %c0_i32 : i32
    %1 = arith.extui %0 : i1 to i32
    %c0_i32_0 = arith.constant 0 : i32
    %2 = arith.cmpi ne, %1, %c0_i32_0 : i32
    scf.if %2 {
      %cst_15 = arith.constant 0.000000e+00 : f32
      %18 = vector.broadcast %cst_15 : f32 to vector<16x128xf32>
      %c0_16 = arith.constant 0 : index
      %c0_17 = arith.constant 0 : index
      %19 = vector.load %arg10[%c0_16, %c0_17] : memref<16x128xf32, #tpu.memory_space<vmem>>, vector<16x128xf32>
      tpu.vector_store %arg10[%c0_16, %c0_17], %18 {strides = array<i32>} : memref<16x128xf32, #tpu.memory_space<vmem>>, vector<16x128xf32>,
    } else {
    }
    %c0 = arith.constant 0 : index
    %c0_1 = arith.constant 0 : index
    %3 = vector.load %arg2[%c0, %c0_1] : memref<16x128xf32, #tpu.memory_space<vmem>>, vector<16x128xf32>
    %c0_2 = arith.constant 0 : index
    %c0_3 = arith.constant 0 : index
    %4 = vector.load %arg3[%c0_2, %c0_3] : memref<128x128xf32, #tpu.memory_space<vmem>>, vector<128x128xf32>
    %cst = arith.constant dense<0.000000e+00> : vector<16x128xf32>
    %5 = tpu.matmul %3, %4, %cst {dimension_numbers = #tpu.dot_dimension_numbers<[1], [0], [0], [1], [0, 0, 1, 1], [], []>} : vector<16x128xf32>, vector<128x128xf32>, vector<16x128xf32> -> vector<16x128xf32>
    %c0_4 = arith.constant 0 : index
    %c0_5 = arith.constant 0 : index
    %6 = vector.load %arg4[%c0_4, %c0_5] : memref<1x128xf32, #tpu.memory_space<vmem>>, vector<1x128xf32>
    %7 = vector.broadcast %6 : vector<1x128xf32> to vector<16x128xf32>
    %8 = arith.addf %5, %7 : vector<16x128xf32>
    %9 = math.tanh %8 : vector<16x128xf32>
    %c0_6 = arith.constant 0 : index
    %c0_7 = arith.constant 0 : index
    %10 = vector.load %arg10[%c0_6, %c0_7] : memref<16x128xf32, #tpu.memory_space<vmem>>, vector<16x128xf32>
    %c0_8 = arith.constant 0 : index
    %c0_9 = arith.constant 0 : index
    %11 = vector.load %arg5[%c0_8, %c0_9] : memref<128x128xf32, #tpu.memory_space<vmem>>, vector<128x128xf32>
    %cst_10 = arith.constant dense<0.000000e+00> : vector<16x128xf32>
    %12 = tpu.matmul %9, %11, %cst_10 {dimension_numbers = #tpu.dot_dimension_numbers<[1], [0], [0], [1], [0, 0, 1, 1], [], []>} : vector<16x128xf32>, vector<128x128xf32>, vector<16x128xf32> -> vector<16x128xf32>
    %13 = arith.addf %10, %12 : vector<16x128xf32>
    %c0_11 = arith.constant 0 : index
    %c0_12 = arith.constant 0 : index
    %14 = vector.load %arg10[%c0_11, %c0_12] : memref<16x128xf32, #tpu.memory_space<vmem>>, vector<16x128xf32>
    tpu.vector_store %arg10[%c0_11, %c0_12], %13 {strides = array<i32>} : memref<16x128xf32, #tpu.memory_space<vmem>>, vector<16x128xf32>,
    %c0_i32_13 = arith.constant 0 : i32
    %15 = arith.cmpi eq, %arg1, %c0_i32_13 : i32
    %16 = arith.extui %15 : i1 to i32
    %c0_i32_14 = arith.constant 0 : i32
    %17 = arith.cmpi ne, %16, %c0_i32_14 : i32
    scf.if %17 {
      %c0_15 = arith.constant 0 : index
      %c0_16 = arith.constant 0 : index
      %18 = vector.load %arg10[%c0_15, %c0_16] : memref<16x128xf32, #tpu.memory_space<vmem>>, vector<16x128xf32>
      %c0_17 = arith.constant 0 : index
      %c0_18 = arith.constant 0 : index
      %19 = vector.load %arg6[%c0_17, %c0_18] : memref<1x128xf32, #tpu.memory_space<vmem>>, vector<1x128xf32>
      %20 = vector.broadcast %19 : vector<1x128xf32> to vector<16x128xf32>
      %21 = arith.addf %18, %20 : vector<16x128xf32>
      %22 = arith.negf %21 : vector<16x128xf32>
      %23 = math.exp %22 : vector<16x128xf32>
      %cst_19 = arith.constant 1.000000e+00 : f32
      %24 = vector.broadcast %cst_19 : f32 to vector<16x128xf32>
      %25 = arith.addf %24, %23 : vector<16x128xf32>
      %26 = arith.divf %24, %25 : vector<16x128xf32>
      %27 = tpu.iota {dimensions = array<i32: 1>} : vector<16x128xi32>
      %c3_i32 = arith.constant 3 : i32
      %28 = vector.broadcast %c3_i32 : i32 to vector<16x128xi32>
      %29 = arith.cmpi slt, %27, %28 : vector<16x128xi32>
      %30 = arith.select %29, %26, %21 : vector<16x128xi1>, vector<16x128xf32>
      %c0_20 = arith.constant 0 : index
      %c0_21 = arith.constant 0 : index
      %31 = vector.load %arg8[%c0_20, %c0_21] : memref<16x128xf32, #tpu.memory_space<vmem>>, vector<16x128xf32>
      tpu.vector_store %arg8[%c0_20, %c0_21], %30 {strides = array<i32>} : memref<16x128xf32, #tpu.memory_space<vmem>>, vector<16x128xf32>,
      %32 = vector.extract_strided_slice %26 {offsets = [0, 0], sizes = [16, 3], strides = [1, 1]} : vector<16x128xf32> to vector<16x3xf32>
      %c0_22 = arith.constant 0 : index
      %c0_23 = arith.constant 0 : index
      %33 = vector.load %arg7[%c0_22, %c0_23] : memref<6x16xf32, #tpu.memory_space<vmem>>, vector<6x16xf32>
      %cst_24 = arith.constant dense<0.000000e+00> : vector<6x3xf32>
      %34 = tpu.matmul %33, %32, %cst_24 {dimension_numbers = #tpu.dot_dimension_numbers<[1], [0], [0], [1], [0, 0, 1, 1], [], []>} : vector<6x16xf32>, vector<16x3xf32>, vector<6x3xf32> -> vector<6x3xf32>
      %c0_25 = arith.constant 0 : index
      %c0_26 = arith.constant 0 : index
      %c0_27 = arith.constant 0 : index
      %35 = vector.load %arg9[%c0_25, %c0_26, %c0_27] : memref<1x6x3xf32, #tpu.memory_space<vmem>>, vector<1x6x3xf32>
      %36 = vector.shape_cast %35 : vector<1x6x3xf32> to vector<6x3xf32>
      %37 = vector.shape_cast %34 : vector<6x3xf32> to vector<1x6x3xf32>
      tpu.vector_store %arg9[%c0_25, %c0_26, %c0_27], %37 {strides = array<i32>} : memref<1x6x3xf32, #tpu.memory_space<vmem>>, vector<1x6x3xf32>,
    } else {
    }
    return
  }
  func.func @transform_0(%arg0: i32, %arg1: i32) -> (i32, i32) {
    %c0_i32 = arith.constant 0 : i32
    %c0_i32_0 = arith.constant 0 : i32
    return %arg0, %c0_i32 : i32, i32
  }
  func.func @transform_1(%arg0: i32, %arg1: i32) -> (i32, i32) {
    %c0_i32 = arith.constant 0 : i32
    %c0_i32_0 = arith.constant 0 : i32
    return %c0_i32, %arg1 : i32, i32
  }
  func.func @transform_2(%arg0: i32, %arg1: i32) -> (i32, i32) {
    %c0_i32 = arith.constant 0 : i32
    %c0_i32_0 = arith.constant 0 : i32
    return %c0_i32, %arg1 : i32, i32
  }
  func.func @transform_3(%arg0: i32, %arg1: i32) -> (i32, i32) {
    %c0_i32 = arith.constant 0 : i32
    %c0_i32_0 = arith.constant 0 : i32
    return %arg1, %c0_i32 : i32, i32
  }
  func.func @transform_4(%arg0: i32, %arg1: i32) -> (i32, i32) {
    %c0_i32 = arith.constant 0 : i32
    %c0_i32_0 = arith.constant 0 : i32
    %c0_i32_1 = arith.constant 0 : i32
    return %c0_i32, %c0_i32_0 : i32, i32
  }
  func.func @transform_5(%arg0: i32, %arg1: i32) -> (i32, i32) {
    %c0_i32 = arith.constant 0 : i32
    %c0_i32_0 = arith.constant 0 : i32
    return %c0_i32, %arg0 : i32, i32
  }
  func.func @transform_6(%arg0: i32, %arg1: i32) -> (i32, i32) {
    %c0_i32 = arith.constant 0 : i32
    %c0_i32_0 = arith.constant 0 : i32
    return %arg0, %c0_i32 : i32, i32
  }
  func.func @transform_7(%arg0: i32, %arg1: i32) -> (i32, i32, i32) {
    %c0_i32 = arith.constant 0 : i32
    %c0_i32_0 = arith.constant 0 : i32
    %c0_i32_1 = arith.constant 0 : i32
    return %arg0, %c0_i32, %c0_i32_0 : i32, i32, i32
  }
}

</mosaic_0001>

<llo_original>
// kernel: tpu_custom_call.1
$region0: #{tpu_custom_call.1}
  #allocation0 [shape = 'u32[]', space=smem, size = 0x4, offset = 0x4, fixed_abs, tag = 'smem constant byte address 0x4 - core index']
  #allocation1 [shape = 'u32[72,128]{1,0:T(1,128)}', space=vmem, size = 0x9000, scoped, tag = 'internal scratch']
  #allocation2 [shape = 'f32[16,128]{1,0:T(8,128)}', space=vmem, size = 0x2000, scoped, tag = 'scratch operand']
  %s0 = inlined_call_operand.hbm [shape: f32[16,128], index: 0, kind: input, shape index: {}]
  %s1 = inlined_call_operand.hbm [shape: f32[128,128], index: 1, kind: input, shape index: {}]
  %s2 = inlined_call_operand.vmem [shape: f32[1,128], index: 2, kind: input, shape index: {}]
  %s3 = inlined_call_operand.hbm [shape: f32[128,128], index: 3, kind: input, shape index: {}]
  %s4 = inlined_call_operand.vmem [shape: f32[1,128], index: 4, kind: input, shape index: {}]
  %s5 = inlined_call_operand.hbm [shape: f32[6,16], index: 5, kind: input, shape index: {}]
  %s6 = inlined_call_operand.hbm [shape: f32[16,128], index: 6, kind: output, shape index: {0}]
  %s7 = inlined_call_operand.vmem [shape: f32[1,6,3], index: 7, kind: output, shape index: {1}]
  %8 = xla_tuple %s6, %s7
  %s9 = sld [smem:[#allocation0]]
  $region66: #{tpu_custom_call.1} parent=0
    _
  %s11 = ssub.s32 1, %s9
  %s12 = scalar_select 0, %s11, %s9
  $region1: #{tpu_custom_call.1} parent=0
    #allocation3 [shape = 'u8[8192]{0}', space=vmem, size = 0x2000, scoped, tag = 'input window, operand 0, single buffered']
    #allocation4 [shape = 's32[1]{0}', space=sflag, size = 0x4, scoped, tag = 'scoped memory for tpu_custom_call.1']
    #allocation5 [shape = 's32[1]{0}', space=sflag, size = 0x4, scoped, tag = 'scoped memory for tpu_custom_call.1']
    #allocation6 [shape = 'u8[65536]{0}', space=vmem, size = 0x10000, scoped, tag = 'input window, operand 1, single buffered']
    #allocation7 [shape = 's32[1]{0}', space=sflag, size = 0x4, scoped, tag = 'scoped memory for tpu_custom_call.1']
    #allocation8 [shape = 'u8[65536]{0}', space=vmem, size = 0x10000, scoped, tag = 'input window, operand 3, single buffered']
    #allocation9 [shape = 'u8[4096]{0}', space=vmem, size = 0x1000, scoped, tag = 'input window, operand 5, single buffered']
    #allocation10 [shape = 's32[1]{0}', space=sflag, size = 0x4, scoped, tag = 'scoped memory for tpu_custom_call.1']
    #allocation11 [shape = 'u8[8192]{0}', space=vmem, size = 0x2000, scoped, tag = 'output window, operand 0, single buffered']
    %13 = vsyncpa [#allocation4], 0
    %14 = vsyncpa [#allocation7], 0
    %15 = vsyncpa [#allocation10], 0
    %16 = vsyncpa [#allocation5], 0
    // Predicated region
    $region2: #{tpu_custom_call.1} parent=1 // pred_check
      _
    $region3: #{tpu_custom_call.1} parent=1 // pred_check_branch
      %18 = sbr.rel (0) target = $region5
    $region4: #{tpu_custom_call.1} parent=1 // pred_region
      %20 = vsyncadd [#allocation4], 0
      %s21 = sshll.u32 %s0, 4
      %s22 = int_to_ptr.hbm [resolvable:$true] %s21
      %s23 = sshll.u32 [#allocation3], 4
      %s24 = int_to_ptr.vmem [resolvable:$true] %s23
      %29 = dma.hbm_to_vmem [thread:$0]  %s22, 256, %s24, [#allocation4], 128, 128, 8
    $region5: #{tpu_custom_call.1} parent=1 // pred_fallthru
      _
    // Predicated region
    $region6: #{tpu_custom_call.1} parent=1 // pred_check
      _
    $region7: #{tpu_custom_call.1} parent=1 // pred_check_branch
      %31 = sbr.rel (0) target = $region9
    $region8: #{tpu_custom_call.1} parent=1 // pred_region
      %33 = vsyncadd [#allocation7], 0
      %s34 = sshll.u32 %s1, 4
      %s35 = int_to_ptr.hbm [resolvable:$true] %s34
      %s36 = sshll.u32 [#allocation6], 4
      %s37 = int_to_ptr.vmem [resolvable:$true] %s36
      %42 = dma.hbm_to_vmem [thread:$0]  %s35, 2048, %s37, [#allocation7], 128, 128, 8
    $region9: #{tpu_custom_call.1} parent=1 // pred_fallthru
      _
    // Predicated region
    $region10: #{tpu_custom_call.1} parent=1 // pred_check
      _
    $region11: #{tpu_custom_call.1} parent=1 // pred_check_branch
      %44 = sbr.rel (0) target = $region13
    $region12: #{tpu_custom_call.1} parent=1 // pred_region
      _
    $region13: #{tpu_custom_call.1} parent=1 // pred_fallthru
      _
    // Predicated region
    $region14: #{tpu_custom_call.1} parent=1 // pred_check
      _
    $region15: #{tpu_custom_call.1} parent=1 // pred_check_branch
      %46 = sbr.rel (0) target = $region17
    $region16: #{tpu_custom_call.1} parent=1 // pred_region
      %48 = vsyncadd [#allocation7], 0
      %s49 = sshll.u32 %s3, 4
      %s50 = int_to_ptr.hbm [resolvable:$true] %s49
      %s51 = sshll.u32 [#allocation8], 4
      %s52 = int_to_ptr.vmem [resolvable:$true] %s51
      %57 = dma.hbm_to_vmem [thread:$0]  %s50, 2048, %s52, [#allocation7], 128, 128, 8
    $region17: #{tpu_custom_call.1} parent=1 // pred_fallthru
      _
    // Predicated region
    $region18: #{tpu_custom_call.1} parent=1 // pred_check
      _
    $region19: #{tpu_custom_call.1} parent=1 // pred_check_branch
      %59 = sbr.rel (0) target = $region21
    $region20: #{tpu_custom_call.1} parent=1 // pred_region
      _
    $region21: #{tpu_custom_call.1} parent=1 // pred_fallthru
      _
    // Predicated region
    $region22: #{tpu_custom_call.1} parent=1 // pred_check
      _
    $region23: #{tpu_custom_call.1} parent=1 // pred_check_branch
      %61 = sbr.rel (0) target = $region25
    $region24: #{tpu_custom_call.1} parent=1 // pred_region
      %63 = vsyncadd [#allocation10], 0
      %s65 = sshll.u32 %s5, 4
      %s66 = int_to_ptr.hbm [resolvable:$true] %s65
      %s67 = sshll.u32 [#allocation9], 4
      %s68 = int_to_ptr.vmem [resolvable:$true] %s67
      %70 = dma.hbm_to_vmem [thread:$0]  %s66, 128, %s68, [#allocation10]
    $region25: #{tpu_custom_call.1} parent=1 // pred_fallthru
      _
    // Predicated region
    $region26: #{tpu_custom_call.1} parent=1 // pred_check
      _
    $region27: #{tpu_custom_call.1} parent=1 // pred_check_branch
      %72 = sbr.rel (0) target = $region29
    $region28: #{tpu_custom_call.1} parent=1 // pred_region
      %74 = dma.done [#allocation4], 256
    $region29: #{tpu_custom_call.1} parent=1 // pred_fallthru
      _
    // Predicated region
    $region30: #{tpu_custom_call.1} parent=1 // pred_check
      _
    $region31: #{tpu_custom_call.1} parent=1 // pred_check_branch
      %76 = sbr.rel (0) target = $region33
    $region32: #{tpu_custom_call.1} parent=1 // pred_region
      %78 = dma.done [#allocation7], 2048
    $region33: #{tpu_custom_call.1} parent=1 // pred_fallthru
      _
    // Predicated region
    $region34: #{tpu_custom_call.1} parent=1 // pred_check
      _
    $region35: #{tpu_custom_call.1} parent=1 // pred_check_branch
      %80 = sbr.rel (0) target = $region37
    $region36: #{tpu_custom_call.1} parent=1 // pred_region
      %82 = dma.done [#allocation7], 2048
    $region37: #{tpu_custom_call.1} parent=1 // pred_fallthru
      _
    // Predicated region
    $region38: #{tpu_custom_call.1} parent=1 // pred_check
      _
    $region39: #{tpu_custom_call.1} parent=1 // pred_check_branch
      %84 = sbr.rel (0) target = $region41
    $region40: #{tpu_custom_call.1} parent=1 // pred_region
      %86 = dma.done [#allocation10], 128
    $region41: #{tpu_custom_call.1} parent=1 // pred_fallthru
      _
    %p87 = scmp.eq.s32.totalorder 0, 0
    // Predicated region
    $region42: #{tpu_custom_call.1} parent=1 // pred_check
      %p88 = pneg %p87
    $region43: #{tpu_custom_call.1} parent=1 // pred_check_branch
      %90 = sbr.rel (%p88) target = $region45
    $region44: #{tpu_custom_call.1} parent=1 // pred_region
      %91 = vst [vmem:[#allocation2] sm:$0xff] 0.0
      %92 = vst [vmem:[#allocation2 + $0x8] sm:$0xff] 0.0
    $region45: #{tpu_custom_call.1} parent=1 // pred_fallthru
      _
    %v93 = vld [vmem:[#allocation3] sm:$0xff]
    %v94 = vld [vmem:[#allocation3 + $0x8] sm:$0xff]
    %v95 = vld [vmem:[#allocation6] sm:$0xff]
    %v96 = vld [vmem:[#allocation6 + $0x8] sm:$0xff]
    %v97 = vld [vmem:[#allocation6 + $0x10] sm:$0xff]
    %v98 = vld [vmem:[#allocation6 + $0x18] sm:$0xff]
    %v99 = vld [vmem:[#allocation6 + $0x20] sm:$0xff]
    %v100 = vld [vmem:[#allocation6 + $0x28] sm:$0xff]
    %v101 = vld [vmem:[#allocation6 + $0x30] sm:$0xff]
    %v102 = vld [vmem:[#allocation6 + $0x38] sm:$0xff]
    %v103 = vld [vmem:[#allocation6 + $0x40] sm:$0xff]
    %v104 = vld [vmem:[#allocation6 + $0x48] sm:$0xff]
    %v105 = vld [vmem:[#allocation6 + $0x50] sm:$0xff]
    %v106 = vld [vmem:[#allocation6 + $0x58] sm:$0xff]
    %v107 = vld [vmem:[#allocation6 + $0x60] sm:$0xff]
    %v108 = vld [vmem:[#allocation6 + $0x68] sm:$0xff]
    %v109 = vld [vmem:[#allocation6 + $0x70] sm:$0xff]
    %v110 = vld [vmem:[#allocation6 + $0x78] sm:$0xff]
    %v111 = vld [vmem:[%s2] sm:$0x1]
    %v113 = vperm.slane %v111, 0
    %115 = vmatpush.msra.mxu0 %v110
    %116 = vmatpush.msra.mxu0 %v109
    %117 = vmatpush.msra.mxu0 %v108
    %118 = vmatpush.msra.mxu0 %v107
    %119 = vmatpush.msra.mxu0 %v106
    %120 = vmatpush.msra.mxu0 %v105
    %121 = vmatpush.msra.mxu0 %v104
    %122 = vmatpush.msra.mxu0 %v103
    %123 = vmatpush.msra.mxu0 %v102
    %124 = vmatpush.msra.mxu0 %v101
    %125 = vmatpush.msra.mxu0 %v100
    %126 = vmatpush.msra.mxu0 %v99
    %127 = vmatpush.msra.mxu0 %v98
    %128 = vmatpush.msra.mxu0 %v97
    %129 = vmatpush.msra.mxu0 %v96
    %130 = vmatpush.msra.mxu0 %v95
    %131 = vmatmul.f32.gmra.mxu0 %v93
    %v132 = vpop.f32.mrf.mxu0
    %v133 = vadd.f32 %v113, %v132
    %134 = vmatmul.f32.gmra.mxu0 %v94
    %v135 = vpop.f32.mrf.mxu0
    %v136 = vadd.f32 %v113, %v135
    %137 = vdwg.mxu0
    %v138 = vtanh.pop %v133
    %v139 = vtanh.pop %v136
    %v140 = vld [vmem:[#allocation2] sm:$0xff]
    %v141 = vld [vmem:[#allocation2 + $0x8] sm:$0xff]
    %v142 = vld [vmem:[#allocation8] sm:$0xff]
    %v143 = vld [vmem:[#allocation8 + $0x8] sm:$0xff]
    %v144 = vld [vmem:[#allocation8 + $0x10] sm:$0xff]
    %v145 = vld [vmem:[#allocation8 + $0x18] sm:$0xff]
    %v146 = vld [vmem:[#allocation8 + $0x20] sm:$0xff]
    %v147 = vld [vmem:[#allocation8 + $0x28] sm:$0xff]
    %v148 = vld [vmem:[#allocation8 + $0x30] sm:$0xff]
    %v149 = vld [vmem:[#allocation8 + $0x38] sm:$0xff]
    %v150 = vld [vmem:[#allocation8 + $0x40] sm:$0xff]
    %v151 = vld [vmem:[#allocation8 + $0x48] sm:$0xff]
    %v152 = vld [vmem:[#allocation8 + $0x50] sm:$0xff]
    %v153 = vld [vmem:[#allocation8 + $0x58] sm:$0xff]
    %v154 = vld [vmem:[#allocation8 + $0x60] sm:$0xff]
    %v155 = vld [vmem:[#allocation8 + $0x68] sm:$0xff]
    %v156 = vld [vmem:[#allocation8 + $0x70] sm:$0xff]
    %v157 = vld [vmem:[#allocation8 + $0x78] sm:$0xff]
    %158 = vmatpush.msra.mxu0 %v157
    %159 = vmatpush.msra.mxu0 %v156
    %160 = vmatpush.msra.mxu0 %v155
    %161 = vmatpush.msra.mxu0 %v154
    %162 = vmatpush.msra.mxu0 %v153
    %163 = vmatpush.msra.mxu0 %v152
    %164 = vmatpush.msra.mxu0 %v151
    %165 = vmatpush.msra.mxu0 %v150
    %166 = vmatpush.msra.mxu0 %v149
    %167 = vmatpush.msra.mxu0 %v148
    %168 = vmatpush.msra.mxu0 %v147
    %169 = vmatpush.msra.mxu0 %v146
    %170 = vmatpush.msra.mxu0 %v145
    %171 = vmatpush.msra.mxu0 %v144
    %172 = vmatpush.msra.mxu0 %v143
    %173 = vmatpush.msra.mxu0 %v142
    %174 = vmatmul.f32.gmra.mxu0 %v138
    %v175 = vpop.f32.mrf.mxu0
    %v176 = vadd.f32 0.0, %v175
    %177 = vmatmul.f32.gmra.mxu0 %v139
    %v178 = vpop.f32.mrf.mxu0
    %v179 = vadd.f32 0.0, %v178
    %180 = vdwg.mxu0
    %v181 = vadd.f32 %v140, %v176
    %v182 = vadd.f32 %v141, %v179
    %183 = vst [vmem:[#allocation2] sm:$0xff] %v181
    %184 = vst [vmem:[#allocation2 + $0x8] sm:$0xff] %v182
    // Predicated region
    $region46: #{tpu_custom_call.1} parent=1 // pred_check
      %p185 = pneg %p87
    $region47: #{tpu_custom_call.1} parent=1 // pred_check_branch
      %187 = sbr.rel (%p185) target = $region49
    $region48: #{tpu_custom_call.1} parent=1 // pred_region
      %v188 = vld [vmem:[#allocation2] sm:$0xff]
      %v189 = vld [vmem:[#allocation2 + $0x8] sm:$0xff]
      %v190 = vld [vmem:[%s4] sm:$0x1]
      %v192 = vperm.slane %v190, 0
      %v194 = vadd.f32 %v188, %v192
      %v195 = vadd.f32 %v189, %v192
      %v196 = vxor.u32 %v194, 2147483648
      %v197 = vxor.u32 %v195, 2147483648
      %v198 = vmul.f32 %v196, 1.442695
      %v199 = vpow.pop %v198
      %v200 = vmul.f32 %v197, 1.442695
      %v201 = vpow.pop %v200
      %v202 = vadd.f32 %v199, 1.0
      %v203 = vadd.f32 %v201, 1.0
      %v204 = vrcp.pop %v202
      %v205 = vmul.f32 %v202, %v204
      %v206 = vsub.f32 1.0, %v205
      %v207 = vmul.f32 %v204, %v206
      %v208 = vadd.f32 %v204, %v207
      %vm209 = vweird.f32 %v202
      %vm210 = vweird.f32 %v204
      %vm211 = vmor %vm209, %vm210
      %v212 = vsel %vm211, %v204, %v208
      %v213 = vand.u32 2147483647, %v202
      %vm214 = vcmp.eq.f32.partialorder %v213, 8.507059e+37
      %v215 = vand.u32 %v202, 2147483648
      %v216 = vor.u32 1.1754944e-38, %v215
      %v217 = vsel %vm214, %v216, %v212
      %v218 = vmul.f32 1.0, %v217
      %v219 = vrcp.pop %v203
      %v220 = vmul.f32 %v203, %v219
      %v221 = vsub.f32 1.0, %v220
      %v222 = vmul.f32 %v219, %v221
      %v223 = vadd.f32 %v219, %v222
      %vm224 = vweird.f32 %v203
      %vm225 = vweird.f32 %v219
      %vm226 = vmor %vm224, %vm225
      %v227 = vsel %vm226, %v219, %v223
      %v228 = vand.u32 2147483647, %v203
      %vm229 = vcmp.eq.f32.partialorder %v228, 8.507059e+37
      %v230 = vand.u32 %v203, 2147483648
      %v231 = vor.u32 1.1754944e-38, %v230
      %v232 = vsel %vm229, %v231, %v227
      %v233 = vmul.f32 1.0, %v232
      %v234 = vlaneseq
      %v235 = vand.u32 %v234, 127
      %vm236 = vcmp.lt.s32.totalorder %v235, 3
      %v237 = vsel %vm236, %v218, %v194
      %v238 = vsel %vm236, %v233, %v195
      %239 = vst [vmem:[#allocation11] sm:$0xff] %v237
      %240 = vst [vmem:[#allocation11 + $0x8] sm:$0xff] %v238
      %v241 = vld [vmem:[#allocation9] sm:$0x3f]
      %vm242 = vcmask 130048
      %v244 = vsel %vm242, %v241, 0
      %246 = vmatpush.msra.mxu0 0.0
      %247 = vmatpush.msra.mxu0 0.0
      %248 = vmatpush.msra.mxu0 0.0
      %249 = vmatpush.msra.mxu0 0.0
      %250 = vmatpush.msra.mxu0 0.0
      %251 = vmatpush.msra.mxu0 0.0
      %252 = vmatpush.msra.mxu0 0.0
      %253 = vmatpush.msra.mxu0 0.0
      %254 = vmatpush.msra.mxu0 0.0
      %255 = vmatpush.msra.mxu0 0.0
      %256 = vmatpush.msra.mxu0 0.0
      %257 = vmatpush.msra.mxu0 0.0
      %258 = vmatpush.msra.mxu0 0.0
      %259 = vmatpush.msra.mxu0 0.0
      %260 = vmatpush.msra.mxu0 %v233
      %261 = vmatpush.msra.mxu0 %v218
      %262 = vmatmul.f32.gmra.mxu0 %v244
      %v263 = vpop.f32.mrf.mxu0
      %v264 = vadd.f32 0.0, %v263
      %265 = vdwg.mxu0
      %vm266 = vcmask 21504
      %267 = vst.msk [vmem:[%s7] sm:$0x3f] %vm266, %v264
    $region49: #{tpu_custom_call.1} parent=1 // pred_fallthru
      _
    // Predicated region
    $region50: #{tpu_custom_call.1} parent=1 // pred_check
      _
    $region51: #{tpu_custom_call.1} parent=1 // pred_check_branch
      %269 = sbr.rel (0) target = $region53
    $region52: #{tpu_custom_call.1} parent=1 // pred_region
      %271 = vsyncadd [#allocation5], 0
      %s272 = sshll.u32 [#allocation11], 4
      %s273 = int_to_ptr.vmem [resolvable:$true] %s272
      %s274 = sshll.u32 %s6, 4
      %s275 = int_to_ptr.hbm [resolvable:$true] %s274
      %280 = dma.vmem_to_hbm [thread:$0]  %s273, 256, %s275, [#allocation5], 128, 128, 8
    $region53: #{tpu_custom_call.1} parent=1 // pred_fallthru
      _
    // Predicated region
    $region54: #{tpu_custom_call.1} parent=1 // pred_check
      _
    $region55: #{tpu_custom_call.1} parent=1 // pred_check_branch
      %282 = sbr.rel (0) target = $region57
    $region56: #{tpu_custom_call.1} parent=1 // pred_region
      _
    $region57: #{tpu_custom_call.1} parent=1 // pred_fallthru
      _
    // Predicated region
    $region58: #{tpu_custom_call.1} parent=1 // pred_check
      _
    $region59: #{tpu_custom_call.1} parent=1 // pred_check_branch
      %284 = sbr.rel (0) target = $region61
    $region60: #{tpu_custom_call.1} parent=1 // pred_region
      %286 = dma.done [#allocation5], 256
    $region61: #{tpu_custom_call.1} parent=1 // pred_fallthru
      _
    // Predicated region
    $region62: #{tpu_custom_call.1} parent=1 // pred_check
      _
    $region63: #{tpu_custom_call.1} parent=1 // pred_check_branch
      %288 = sbr.rel (0) target = $region65
    $region64: #{tpu_custom_call.1} parent=1 // pred_region
      _
    $region65: #{tpu_custom_call.1} parent=1 // pred_fallthru
      _
    %289 = vsyncpa [#allocation4], 1
    %290 = vsyncpa [#allocation7], 1
    %291 = vsyncpa [#allocation10], 1
    %292 = vsyncpa [#allocation5], 1

// kernel: tpu_custom_call.1
$region0: #{tpu_custom_call.1}
  #allocation0 [shape = 'u32[]', space=smem, size = 0x4, offset = 0x4, fixed_abs, tag = 'smem constant byte address 0x4 - core index']
  #allocation1 [shape = 'u32[72,128]{1,0:T(1,128)}', space=vmem, size = 0x9000, scoped, tag = 'internal scratch']
  #allocation2 [shape = 'f32[16,128]{1,0:T(8,128)}', space=vmem, size = 0x2000, scoped, tag = 'scratch operand']
  %s0 = inlined_call_operand.hbm [shape: f32[16,128], index: 0, kind: input, shape index: {}]
  %s1 = inlined_call_operand.hbm [shape: f32[128,128], index: 1, kind: input, shape index: {}]
  %s2 = inlined_call_operand.vmem [shape: f32[1,128], index: 2, kind: input, shape index: {}]
  %s3 = inlined_call_operand.hbm [shape: f32[128,128], index: 3, kind: input, shape index: {}]
  %s4 = inlined_call_operand.vmem [shape: f32[1,128], index: 4, kind: input, shape index: {}]
  %s5 = inlined_call_operand.hbm [shape: f32[6,16], index: 5, kind: input, shape index: {}]
  %s6 = inlined_call_operand.hbm [shape: f32[16,128], index: 6, kind: output, shape index: {0}]
  %s7 = inlined_call_operand.vmem [shape: f32[1,6,3], index: 7, kind: output, shape index: {1}]
  %8 = xla_tuple %s6, %s7
  %s9 = sld [smem:[#allocation0]]
  $region66: #{tpu_custom_call.1} parent=0
    _
  %s11 = ssub.s32 1, %s9
  %s12 = scalar_select 0, %s11, %s9
  $region1: #{tpu_custom_call.1} parent=0
    #allocation3 [shape = 'u8[8192]{0}', space=vmem, size = 0x2000, scoped, tag = 'input window, operand 0, single buffered']
    #allocation4 [shape = 's32[1]{0}', space=sflag, size = 0x4, scoped, tag = 'scoped memory for tpu_custom_call.1']
    #allocation5 [shape = 's32[1]{0}', space=sflag, size = 0x4, scoped, tag = 'scoped memory for tpu_custom_call.1']
    #allocation6 [shape = 'u8[65536]{0}', space=vmem, size = 0x10000, scoped, tag = 'input window, operand 1, single buffered']
    #allocation7 [shape = 's32[1]{0}', space=sflag, size = 0x4, scoped, tag = 'scoped memory for tpu_custom_call.1']
    #allocation8 [shape = 'u8[65536]{0}', space=vmem, size = 0x10000, scoped, tag = 'input window, operand 3, single buffered']
    #allocation9 [shape = 'u8[4096]{0}', space=vmem, size = 0x1000, scoped, tag = 'input window, operand 5, single buffered']
    #allocation10 [shape = 's32[1]{0}', space=sflag, size = 0x4, scoped, tag = 'scoped memory for tpu_custom_call.1']
    #allocation11 [shape = 'u8[8192]{0}', space=vmem, size = 0x2000, scoped, tag = 'output window, operand 0, single buffered']
    %13 = vsyncpa [#allocation4], 0
    %14 = vsyncpa [#allocation7], 0
    %15 = vsyncpa [#allocation10], 0
    %16 = vsyncpa [#allocation5], 0
    // Predicated region
    $region2: #{tpu_custom_call.1} parent=1 // pred_check
      _
    $region3: #{tpu_custom_call.1} parent=1 // pred_check_branch
      %18 = sbr.rel (0) target = $region5
    $region4: #{tpu_custom_call.1} parent=1 // pred_region
      %20 = vsyncadd [#allocation4], 0
      %s21 = sshll.u32 %s0, 4
      %s22 = int_to_ptr.hbm [resolvable:$true] %s21
      %s23 = sshll.u32 [#allocation3], 4
      %s24 = int_to_ptr.vmem [resolvable:$true] %s23
      %29 = dma.hbm_to_vmem [thread:$0]  %s22, 256, %s24, [#allocation4], 128, 128, 8
    $region5: #{tpu_custom_call.1} parent=1 // pred_fallthru
      _
    // Predicated region
    $region6: #{tpu_custom_call.1} parent=1 // pred_check
      _
    $region7: #{tpu_custom_call.1} parent=1 // pred_check_branch
      %31 = sbr.rel (0) target = $region9
    $region8: #{tpu_custom_call.1} parent=1 // pred_region
      %33 = vsyncadd [#allocation7], 0
      %s34 = sshll.u32 %s1, 4
      %s35 = int_to_ptr.hbm [resolvable:$true] %s34
      %s36 = sshll.u32 [#allocation6], 4
      %s37 = int_to_ptr.vmem [resolvable:$true] %s36
      %42 = dma.hbm_to_vmem [thread:$0]  %s35, 2048, %s37, [#allocation7], 128, 128, 8
    $region9: #{tpu_custom_call.1} parent=1 // pred_fallthru
      _
    // Predicated region
    $region10: #{tpu_custom_call.1} parent=1 // pred_check
      _
    $region11: #{tpu_custom_call.1} parent=1 // pred_check_branch
      %44 = sbr.rel (0) target = $region13
    $region12: #{tpu_custom_call.1} parent=1 // pred_region
      _
    $region13: #{tpu_custom_call.1} parent=1 // pred_fallthru
      _
    // Predicated region
    $region14: #{tpu_custom_call.1} parent=1 // pred_check
      _
    $region15: #{tpu_custom_call.1} parent=1 // pred_check_branch
      %46 = sbr.rel (0) target = $region17
    $region16: #{tpu_custom_call.1} parent=1 // pred_region
      %48 = vsyncadd [#allocation7], 0
      %s49 = sshll.u32 %s3, 4
      %s50 = int_to_ptr.hbm [resolvable:$true] %s49
      %s51 = sshll.u32 [#allocation8], 4
      %s52 = int_to_ptr.vmem [resolvable:$true] %s51
      %57 = dma.hbm_to_vmem [thread:$0]  %s50, 2048, %s52, [#allocation7], 128, 128, 8
    $region17: #{tpu_custom_call.1} parent=1 // pred_fallthru
      _
    // Predicated region
    $region18: #{tpu_custom_call.1} parent=1 // pred_check
      _
    $region19: #{tpu_custom_call.1} parent=1 // pred_check_branch
      %59 = sbr.rel (0) target = $region21
    $region20: #{tpu_custom_call.1} parent=1 // pred_region
      _
    $region21: #{tpu_custom_call.1} parent=1 // pred_fallthru
      _
    // Predicated region
    $region22: #{tpu_custom_call.1} parent=1 // pred_check
      _
    $region23: #{tpu_custom_call.1} parent=1 // pred_check_branch
      %61 = sbr.rel (0) target = $region25
    $region24: #{tpu_custom_call.1} parent=1 // pred_region
      %63 = vsyncadd [#allocation10], 0
      %s65 = sshll.u32 %s5, 4
      %s66 = int_to_ptr.hbm [resolvable:$true] %s65
      %s67 = sshll.u32 [#allocation9], 4
      %s68 = int_to_ptr.vmem [resolvable:$true] %s67
      %70 = dma.hbm_to_vmem [thread:$0]  %s66, 128, %s68, [#allocation10]
    $region25: #{tpu_custom_call.1} parent=1 // pred_fallthru
      _
    // Predicated region
    $region26: #{tpu_custom_call.1} parent=1 // pred_check
      _
    $region27: #{tpu_custom_call.1} parent=1 // pred_check_branch
      %72 = sbr.rel (0) target = $region29
    $region28: #{tpu_custom_call.1} parent=1 // pred_region
      %74 = dma.done [#allocation4], 256
    $region29: #{tpu_custom_call.1} parent=1 // pred_fallthru
      _
    // Predicated region
    $region30: #{tpu_custom_call.1} parent=1 // pred_check
      _
    $region31: #{tpu_custom_call.1} parent=1 // pred_check_branch
      %76 = sbr.rel (0) target = $region33
    $region32: #{tpu_custom_call.1} parent=1 // pred_region
      %78 = dma.done [#allocation7], 2048
    $region33: #{tpu_custom_call.1} parent=1 // pred_fallthru
      _
    // Predicated region
    $region34: #{tpu_custom_call.1} parent=1 // pred_check
      _
    $region35: #{tpu_custom_call.1} parent=1 // pred_check_branch
      %80 = sbr.rel (0) target = $region37
    $region36: #{tpu_custom_call.1} parent=1 // pred_region
      %82 = dma.done [#allocation7], 2048
    $region37: #{tpu_custom_call.1} parent=1 // pred_fallthru
      _
    // Predicated region
    $region38: #{tpu_custom_call.1} parent=1 // pred_check
      _
    $region39: #{tpu_custom_call.1} parent=1 // pred_check_branch
      %84 = sbr.rel (0) target = $region41
    $region40: #{tpu_custom_call.1} parent=1 // pred_region
      %86 = dma.done [#allocation10], 128
    $region41: #{tpu_custom_call.1} parent=1 // pred_fallthru
      _
    %p87 = scmp.eq.s32.totalorder 0, 0
    // Predicated region
    $region42: #{tpu_custom_call.1} parent=1 // pred_check
      %p88 = pneg %p87
    $region43: #{tpu_custom_call.1} parent=1 // pred_check_branch
      %90 = sbr.rel (%p88) target = $region45
    $region44: #{tpu_custom_call.1} parent=1 // pred_region
      %91 = vst [vmem:[#allocation2] sm:$0xff] 0.0
      %92 = vst [vmem:[#allocation2 + $0x8] sm:$0xff] 0.0
    $region45: #{tpu_custom_call.1} parent=1 // pred_fallthru
      _
    %v93 = vld [vmem:[#allocation3] sm:$0xff]
    %v94 = vld [vmem:[#allocation3 + $0x8] sm:$0xff]
    %v95 = vld [vmem:[#allocation6] sm:$0xff]
    %v96 = vld [vmem:[#allocation6 + $0x8] sm:$0xff]
    %v97 = vld [vmem:[#allocation6 + $0x10] sm:$0xff]
    %v98 = vld [vmem:[#allocation6 + $0x18] sm:$0xff]
    %v99 = vld [vmem:[#allocation6 + $0x20] sm:$0xff]
    %v100 = vld [vmem:[#allocation6 + $0x28] sm:$0xff]
    %v101 = vld [vmem:[#allocation6 + $0x30] sm:$0xff]
    %v102 = vld [vmem:[#allocation6 + $0x38] sm:$0xff]
    %v103 = vld [vmem:[#allocation6 + $0x40] sm:$0xff]
    %v104 = vld [vmem:[#allocation6 + $0x48] sm:$0xff]
    %v105 = vld [vmem:[#allocation6 + $0x50] sm:$0xff]
    %v106 = vld [vmem:[#allocation6 + $0x58] sm:$0xff]
    %v107 = vld [vmem:[#allocation6 + $0x60] sm:$0xff]
    %v108 = vld [vmem:[#allocation6 + $0x68] sm:$0xff]
    %v109 = vld [vmem:[#allocation6 + $0x70] sm:$0xff]
    %v110 = vld [vmem:[#allocation6 + $0x78] sm:$0xff]
    %v111 = vld [vmem:[%s2] sm:$0x1]
    %v113 = vperm.slane %v111, 0
    %115 = vmatpush.msra.mxu0 %v110
    %116 = vmatpush.msra.mxu0 %v109
    %117 = vmatpush.msra.mxu0 %v108
    %118 = vmatpush.msra.mxu0 %v107
    %119 = vmatpush.msra.mxu0 %v106
    %120 = vmatpush.msra.mxu0 %v105
    %121 = vmatpush.msra.mxu0 %v104
    %122 = vmatpush.msra.mxu0 %v103
    %123 = vmatpush.msra.mxu0 %v102
    %124 = vmatpush.msra.mxu0 %v101
    %125 = vmatpush.msra.mxu0 %v100
    %126 = vmatpush.msra.mxu0 %v99
    %127 = vmatpush.msra.mxu0 %v98
    %128 = vmatpush.msra.mxu0 %v97
    %129 = vmatpush.msra.mxu0 %v96
    %130 = vmatpush.msra.mxu0 %v95
    %131 = vmatmul.f32.gmra.mxu0 %v93
    %v132 = vpop.f32.mrf.mxu0
    %v133 = vadd.f32 %v113, %v132
    %134 = vmatmul.f32.gmra.mxu0 %v94
    %v135 = vpop.f32.mrf.mxu0
    %v136 = vadd.f32 %v113, %v135
    %137 = vdwg.mxu0
    %v138 = vtanh.pop %v133
    %v139 = vtanh.pop %v136
    %v140 = vld [vmem:[#allocation2] sm:$0xff]
    %v141 = vld [vmem:[#allocation2 + $0x8] sm:$0xff]
    %v142 = vld [vmem:[#allocation8] sm:$0xff]
    %v143 = vld [vmem:[#allocation8 + $0x8] sm:$0xff]
    %v144 = vld [vmem:[#allocation8 + $0x10] sm:$0xff]
    %v145 = vld [vmem:[#allocation8 + $0x18] sm:$0xff]
    %v146 = vld [vmem:[#allocation8 + $0x20] sm:$0xff]
    %v147 = vld [vmem:[#allocation8 + $0x28] sm:$0xff]
    %v148 = vld [vmem:[#allocation8 + $0x30] sm:$0xff]
    %v149 = vld [vmem:[#allocation8 + $0x38] sm:$0xff]
    %v150 = vld [vmem:[#allocation8 + $0x40] sm:$0xff]
    %v151 = vld [vmem:[#allocation8 + $0x48] sm:$0xff]
    %v152 = vld [vmem:[#allocation8 + $0x50] sm:$0xff]
    %v153 = vld [vmem:[#allocation8 + $0x58] sm:$0xff]
    %v154 = vld [vmem:[#allocation8 + $0x60] sm:$0xff]
    %v155 = vld [vmem:[#allocation8 + $0x68] sm:$0xff]
    %v156 = vld [vmem:[#allocation8 + $0x70] sm:$0xff]
    %v157 = vld [vmem:[#allocation8 + $0x78] sm:$0xff]
    %158 = vmatpush.msra.mxu0 %v157
    %159 = vmatpush.msra.mxu0 %v156
    %160 = vmatpush.msra.mxu0 %v155
    %161 = vmatpush.msra.mxu0 %v154
    %162 = vmatpush.msra.mxu0 %v153
    %163 = vmatpush.msra.mxu0 %v152
    %164 = vmatpush.msra.mxu0 %v151
    %165 = vmatpush.msra.mxu0 %v150
    %166 = vmatpush.msra.mxu0 %v149
    %167 = vmatpush.msra.mxu0 %v148
    %168 = vmatpush.msra.mxu0 %v147
    %169 = vmatpush.msra.mxu0 %v146
    %170 = vmatpush.msra.mxu0 %v145
    %171 = vmatpush.msra.mxu0 %v144
    %172 = vmatpush.msra.mxu0 %v143
    %173 = vmatpush.msra.mxu0 %v142
    %174 = vmatmul.f32.gmra.mxu0 %v138
    %v175 = vpop.f32.mrf.mxu0
    %v176 = vadd.f32 0.0, %v175
    %177 = vmatmul.f32.gmra.mxu0 %v139
    %v178 = vpop.f32.mrf.mxu0
    %v179 = vadd.f32 0.0, %v178
    %180 = vdwg.mxu0
    %v181 = vadd.f32 %v140, %v176
    %v182 = vadd.f32 %v141, %v179
    %183 = vst [vmem:[#allocation2] sm:$0xff] %v181
    %184 = vst [vmem:[#allocation2 + $0x8] sm:$0xff] %v182
    // Predicated region
    $region46: #{tpu_custom_call.1} parent=1 // pred_check
      %p185 = pneg %p87
    $region47: #{tpu_custom_call.1} parent=1 // pred_check_branch
      %187 = sbr.rel (%p185) target = $region49
    $region48: #{tpu_custom_call.1} parent=1 // pred_region
      %v188 = vld [vmem:[#allocation2] sm:$0xff]
      %v189 = vld [vmem:[#allocation2 + $0x8] sm:$0xff]
      %v190 = vld [vmem:[%s4] sm:$0x1]
      %v192 = vperm.slane %v190, 0
      %v194 = vadd.f32 %v188, %v192
      %v195 = vadd.f32 %v189, %v192
      %v196 = vxor.u32 %v194, 2147483648
      %v197 = vxor.u32 %v195, 2147483648
      %v198 = vmul.f32 %v196, 1.442695
      %v199 = vpow.pop %v198
      %v200 = vmul.f32 %v197, 1.442695
      %v201 = vpow.pop %v200
      %v202 = vadd.f32 %v199, 1.0
      %v203 = vadd.f32 %v201, 1.0
      %v204 = vrcp.pop %v202
      %v205 = vmul.f32 %v202, %v204
      %v206 = vsub.f32 1.0, %v205
      %v207 = vmul.f32 %v204, %v206
      %v208 = vadd.f32 %v204, %v207
      %vm209 = vweird.f32 %v202
      %vm210 = vweird.f32 %v204
      %vm211 = vmor %vm209, %vm210
      %v212 = vsel %vm211, %v204, %v208
      %v213 = vand.u32 2147483647, %v202
      %vm214 = vcmp.eq.f32.partialorder %v213, 8.507059e+37
      %v215 = vand.u32 %v202, 2147483648
      %v216 = vor.u32 1.1754944e-38, %v215
      %v217 = vsel %vm214, %v216, %v212
      %v218 = vmul.f32 1.0, %v217
      %v219 = vrcp.pop %v203
      %v220 = vmul.f32 %v203, %v219
      %v221 = vsub.f32 1.0, %v220
      %v222 = vmul.f32 %v219, %v221
      %v223 = vadd.f32 %v219, %v222
      %vm224 = vweird.f32 %v203
      %vm225 = vweird.f32 %v219
      %vm226 = vmor %vm224, %vm225
      %v227 = vsel %vm226, %v219, %v223
      %v228 = vand.u32 2147483647, %v203
      %vm229 = vcmp.eq.f32.partialorder %v228, 8.507059e+37
      %v230 = vand.u32 %v203, 2147483648
      %v231 = vor.u32 1.1754944e-38, %v230
      %v232 = vsel %vm229, %v231, %v227
      %v233 = vmul.f32 1.0, %v232
      %v234 = vlaneseq
      %v235 = vand.u32 %v234, 127
      %vm236 = vcmp.lt.s32.totalorder %v235, 3
      %v237 = vsel %vm236, %v218, %v194
      %v238 = vsel %vm236, %v233, %v195
      %239 = vst [vmem:[#allocation11] sm:$0xff] %v237
      %240 = vst [vmem:[#allocation11 + $0x8] sm:$0xff] %v238
      %v241 = vld [vmem:[#allocation9] sm:$0x3f]
      %vm242 = vcmask 130048
      %v244 = vsel %vm242, %v241, 0
      %246 = vmatpush.msra.mxu0 0.0
      %247 = vmatpush.msra.mxu0 0.0
      %248 = vmatpush.msra.mxu0 0.0
      %249 = vmatpush.msra.mxu0 0.0
      %250 = vmatpush.msra.mxu0 0.0
      %251 = vmatpush.msra.mxu0 0.0
      %252 = vmatpush.msra.mxu0 0.0
      %253 = vmatpush.msra.mxu0 0.0
      %254 = vmatpush.msra.mxu0 0.0
      %255 = vmatpush.msra.mxu0 0.0
      %256 = vmatpush.msra.mxu0 0.0
      %257 = vmatpush.msra.mxu0 0.0
      %258 = vmatpush.msra.mxu0 0.0
      %259 = vmatpush.msra.mxu0 0.0
      %260 = vmatpush.msra.mxu0 %v233
      %261 = vmatpush.msra.mxu0 %v218
      %262 = vmatmul.f32.gmra.mxu0 %v244
      %v263 = vpop.f32.mrf.mxu0
      %v264 = vadd.f32 0.0, %v263
      %265 = vdwg.mxu0
      %vm266 = vcmask 21504
      %267 = vst.msk [vmem:[%s7] sm:$0x3f] %vm266, %v264
    $region49: #{tpu_custom_call.1} parent=1 // pred_fallthru
      _
    // Predicated region
    $region50: #{tpu_custom_call.1} parent=1 // pred_check
      _
    $region51: #{tpu_custom_call.1} parent=1 // pred_check_branch
      %269 = sbr.rel (0) target = $region53
    $region52: #{tpu_custom_call.1} parent=1 // pred_region
      %271 = vsyncadd [#allocation5], 0
      %s272 = sshll.u32 [#allocation11], 4
      %s273 = int_to_ptr.vmem [resolvable:$true] %s272
      %s274 = sshll.u32 %s6, 4
      %s275 = int_to_ptr.hbm [resolvable:$true] %s274
      %280 = dma.vmem_to_hbm [thread:$0]  %s273, 256, %s275, [#allocation5], 128, 128, 8
    $region53: #{tpu_custom_call.1} parent=1 // pred_fallthru
      _
    // Predicated region
    $region54: #{tpu_custom_call.1} parent=1 // pred_check
      _
    $region55: #{tpu_custom_call.1} parent=1 // pred_check_branch
      %282 = sbr.rel (0) target = $region57
    $region56: #{tpu_custom_call.1} parent=1 // pred_region
      _
    $region57: #{tpu_custom_call.1} parent=1 // pred_fallthru
      _
    // Predicated region
    $region58: #{tpu_custom_call.1} parent=1 // pred_check
      _
    $region59: #{tpu_custom_call.1} parent=1 // pred_check_branch
      %284 = sbr.rel (0) target = $region61
    $region60: #{tpu_custom_call.1} parent=1 // pred_region
      %286 = dma.done [#allocation5], 256
    $region61: #{tpu_custom_call.1} parent=1 // pred_fallthru
      _
    // Predicated region
    $region62: #{tpu_custom_call.1} parent=1 // pred_check
      _
    $region63: #{tpu_custom_call.1} parent=1 // pred_check_branch
      %288 = sbr.rel (0) target = $region65
    $region64: #{tpu_custom_call.1} parent=1 // pred_region
      _
    $region65: #{tpu_custom_call.1} parent=1 // pred_fallthru
      _
    %289 = vsyncpa [#allocation4], 1
    %290 = vsyncpa [#allocation7], 1
    %291 = vsyncpa [#allocation10], 1
    %292 = vsyncpa [#allocation5], 1

</llo_original>
